<compile_context>
chip_gen: v7x
topology: tpu7x:2x2x1
jax: 0.10.0
libtpu: 0.0.40
codegen_flags: <defaults>
</compile_context>

<pallas_src>
import functools
import math

import jax
import jax.numpy as jnp
from jax import lax
from jax.experimental import pallas as pl
from jax.experimental.pallas import tpu as pltpu

EPS = 1e-5
LANES = 128
SUBLANES = 8


def _round_up(x, m):
    return ((x + m - 1) // m) * m


def _vmem_budget_bytes():
    """~80% of physical per-core VMEM: ~51 MiB on v7x, ~102 MiB on v5e/v6e."""
    cap = 64 * 1024 * 1024            # conservative fallback (v7x-sized)
    try:
        info = pltpu.get_tpu_info()
        cap = int(getattr(info, "vmem_capacity_bytes", cap) or cap)
    except Exception:
        pass
    return int(max(32 * 1024 * 1024, min(cap * 0.8, 112 * 1024 * 1024)))


def _conv_accum(xa_ref, xb_ref, w_ref, *, tq, wp, kh, kw, stride):
    """f32 (C_pad8, TQ) conv accumulator over this q-tile of the virtual grid."""
    # Stitch the q-tile window (tile + halo) from two consecutive flat blocks;
    # all further slicing is static, so no dynamic lane indexing is needed.
    window = jnp.concatenate([xa_ref[0], xb_ref[0]], axis=-1)  # (C_in, 2*TQ*stride)
    acc = None
    for t in range(kh * kw):
        i, j = divmod(t, kw)
        d = i * wp + j
        if stride == 1:
            patch = window[:, d:d + tq]                        # (C_in, TQ)
        else:
            # TODO(synk): stride>1 (lane-strided static slice) is untested here;
            # the demo below exercises stride=1 only.
            patch = window[:, d:d + (tq - 1) * stride + 1:stride]
        term = jnp.dot(w_ref[t], patch, preferred_element_type=jnp.float32)
        acc = term if acc is None else acc + term
    return acc


def _stats_kernel(xa_ref, xb_ref, mask_ref, w_ref, stats_ref, *rest,
                  tq, wp, kh, kw, stride, store_y):
    acc = _conv_accum(xa_ref, xb_ref, w_ref, tq=tq, wp=wp, kh=kh, kw=kw, stride=stride)
    vm = mask_ref[...]                                    # (1, TQ) validity mask
    am = acc * vm
    s1 = jnp.sum(am, axis=1, keepdims=True)               # sum(y)   over valid cols
    s2 = jnp.sum(am * acc, axis=1, keepdims=True)         # sum(y^2) over valid cols
    stats_ref[0, 0] = jnp.concatenate([s1, s2], axis=1)   # (C_pad8, 2)
    if store_y:
        y_ref = rest[0]
        y_ref[0] = acc.astype(y_ref.dtype)


def _apply_recompute_kernel(xa_ref, xb_ref, w_ref, scale_ref, shift_ref, o_ref, *,
                            tq, wp, kh, kw, stride):
    acc = _conv_accum(xa_ref, xb_ref, w_ref, tq=tq, wp=wp, kh=kh, kw=kw, stride=stride)
    o_ref[0] = jnp.maximum(acc * scale_ref[...] + shift_ref[...], 0.0).astype(o_ref.dtype)


def _apply_saved_kernel(y_ref, scale_ref, shift_ref, o_ref):
    y = y_ref[0].astype(jnp.float32)
    o_ref[0] = jnp.maximum(y * scale_ref[...] + shift_ref[...], 0.0).astype(o_ref.dtype)


def single_conv(x, weight, gamma, beta, stride, padding, *,
                tq=None, store_y=None, store_y_threshold_k=512):
    """Conv2d(bias=False) -> BatchNorm2d(batch stats) -> ReLU; NCHW in / NCHW out."""
    n, c_in, h, w = x.shape
    c_out, c_in_w, kh, kw = weight.shape
    assert c_in_w == c_in
    hp, wp = h + 2 * padding, w + 2 * padding
    h_out = (hp - kh) // stride + 1
    w_out = (wp - kw) // stride + 1
    assert h_out > 0 and w_out > 0

    cp = _round_up(c_out, SUBLANES)      # pad channels to the sublane granule only
    taps = kh * kw
    k_total = taps * c_in
    if store_y is None:
        # Small K: recompute the conv in pass 2.  Large (compute-bound) K:
        # stream y out of pass 1 as bf16 and make pass 2 matmul-free.
        store_y = k_total >= store_y_threshold_k

    lq = h_out * wp                       # virtual flat output length per image
    halo = (kh - 1) * wp + kw             # extra flat input needed past a q-tile
    budget = _vmem_budget_bytes()

    # ---- pick the q-tile (multiple of 128 lanes) from the VMEM budget -------
    if tq is None:
        per_q = (4 * c_in * stride * 2    # xa+xb blocks, double-buffered, bf16
                 + 2 * cp * 4             # f32 output tile, double-buffered
                 + 2 * c_in * stride * 2  # stitched window temporary
                 + cp * 4)                # f32 accumulator
        if store_y:
            per_q += 2 * cp * 2           # bf16 y tile, double-buffered
        resident = taps * cp * c_in * 2 + (2 << 20)
        tq = (budget - resident) // max(per_q, 1)
    tq = int(min(int(tq), 4096, _round_up(lq, LANES)))
    tq = max((tq // LANES) * LANES, LANES,
             _round_up(-(-halo // stride), LANES))   # tile*stride must cover the halo

    bq = tq * stride                      # flat input elements per q-tile block
    lq_pad = _round_up(lq, tq)
    n_qt = lq_pad // tq
    l_in = _round_up(max((n_qt + 1) * bq, hp * wp), bq)
    m_real = n * h_out * w_out

    # ---- wrapper prep: spatial zero-pad + flatten (no transpose, no im2col) --
    xp = jnp.pad(x, ((0, 0), (0, 0), (padding, padding), (padding, padding)))
    x_flat = xp.reshape(n, c_in, hp * wp)
    x_flat = jnp.pad(x_flat, ((0, 0), (0, 0), (0, l_in - hp * wp))).astype(jnp.bfloat16)

    w_t = jnp.transpose(weight, (2, 3, 0, 1)).reshape(taps, c_out, c_in)
    w_t = jnp.pad(w_t, ((0, 0), (0, cp - c_out), (0, 0))).astype(jnp.bfloat16)

    q_ids = jnp.arange(lq_pad, dtype=jnp.int32)
    colmask = (((q_ids % wp) < w_out) & (q_ids < lq)).astype(jnp.float32)
    colmask = colmask.reshape(1, lq_pad)

    cparams = pltpu.CompilerParams(
        dimension_semantics=("parallel", "parallel"),
        vmem_limit_bytes=budget,
    )

    xa_spec = pl.BlockSpec((1, c_in, bq), lambda b, q: (b, 0, q))
    xb_spec = pl.BlockSpec((1, c_in, bq), lambda b, q: (b, 0, q + 1))   # halo block
    w_spec = pl.BlockSpec((taps, cp, c_in), lambda b, q: (0, 0, 0))     # resident
    mask_spec = pl.BlockSpec((1, tq), lambda b, q: (0, q))
    vec_spec = pl.BlockSpec((cp, 1), lambda b, q: (0, 0))
    tile_spec = pl.BlockSpec((1, cp, tq), lambda b, q: (b, 0, q))
    stats_spec = pl.BlockSpec((1, 1, cp, 2), lambda b, q: (b, q, 0, 0))

    conv_flops = 2 * n * lq_pad * cp * c_in * taps
    x_bytes = 2 * n * c_in * l_in * 2     # each flat block read ~twice (tile + halo)
    w_bytes = taps * cp * c_in * 2
    stats_bytes = n * n_qt * cp * 2 * 4
    y_bytes = n * cp * lq_pad * 2
    out_bytes = n * cp * lq_pad * 4

    # ---- Pass 1: conv + masked per-tile channel sums / sums of squares -------
    p1_shapes = [jax.ShapeDtypeStruct((n, n_qt, cp, 2), jnp.float32)]
    p1_specs = [stats_spec]
    if store_y:
        p1_shapes.append(jax.ShapeDtypeStruct((n, cp, lq_pad), jnp.bfloat16))
        p1_specs.append(tile_spec)
    p1 = pl.pallas_call(
        functools.partial(_stats_kernel, tq=tq, wp=wp, kh=kh, kw=kw,
                          stride=stride, store_y=store_y),
        out_shape=tuple(p1_shapes),
        grid=(n, n_qt),
        in_specs=[xa_spec, xb_spec, mask_spec, w_spec],
        out_specs=tuple(p1_specs),
        compiler_params=cparams,
        cost_estimate=pl.CostEstimate(
            flops=conv_flops, transcendentals=0,
            bytes_accessed=x_bytes + w_bytes + stats_bytes
            + (y_bytes if store_y else 0)),
    )(x_flat, x_flat, colmask, w_t)
    stats = p1[0]
    y_saved = p1[1] if store_y else None

    # ---- tiny XLA combine: global batch stats -> folded affine ---------------
    # TODO(synk): Chan/Welford-style merge if |mean| >> std at very large M.
    sum_c = jnp.sum(stats[..., 0], axis=(0, 1))
    ssq_c = jnp.sum(stats[..., 1], axis=(0, 1))
    mean = sum_c / m_real
    var = jnp.maximum(ssq_c / m_real - mean * mean, 0.0)   # biased var (BN training)
    inv_std = lax.rsqrt(var + EPS)
    gamma_p = jnp.pad(gamma.astype(jnp.float32), (0, cp - c_out), constant_values=1.0)
    beta_p = jnp.pad(beta.astype(jnp.float32), (0, cp - c_out))
    scale = (gamma_p * inv_std).reshape(cp, 1)
    shift = (beta_p - mean * gamma_p * inv_std).reshape(cp, 1)

    # ---- Pass 2: folded BN affine + ReLU (recompute conv, or read saved y) ---
    out_sds = jax.ShapeDtypeStruct((n, cp, lq_pad), jnp.float32)
    if store_y:
        out_flat = pl.pallas_call(
            _apply_saved_kernel,
            out_shape=out_sds,
            grid=(n, n_qt),
            in_specs=[tile_spec, vec_spec, vec_spec],
            out_specs=tile_spec,
            compiler_params=cparams,
            cost_estimate=pl.CostEstimate(
                flops=3 * n * lq_pad * cp, transcendentals=0,
                bytes_accessed=y_bytes + out_bytes),
        )(y_saved, scale, shift)
    else:
        out_flat = pl.pallas_call(
            functools.partial(_apply_recompute_kernel, tq=tq, wp=wp, kh=kh, kw=kw,
                              stride=stride),
            out_shape=out_sds,
            grid=(n, n_qt),
            in_specs=[xa_spec, xb_spec, w_spec, vec_spec, vec_spec],
            out_specs=tile_spec,
            compiler_params=cparams,
            cost_estimate=pl.CostEstimate(
                flops=conv_flops + 3 * n * lq_pad * cp, transcendentals=0,
                bytes_accessed=x_bytes + w_bytes + out_bytes),
        )(x_flat, x_flat, w_t, scale, shift)

    # Channel-major output maps to NCHW with a cheap slice + reshape (the old
    # full-tensor NHWC->NCHW transpose is gone).
    out = out_flat[:, :c_out, :lq].reshape(n, c_out, h_out, wp)[:, :, :, :w_out]
    return out


# ----------------------------- Reference (pure XLA) ---------------------------
def _reference(x, weight, gamma, beta, stride, padding):
    y = lax.conv_general_dilated(
        x, weight,
        window_strides=(stride, stride),
        padding=[(padding, padding), (padding, padding)],
        dimension_numbers=("NCHW", "OIHW", "NCHW"),
    )
    mean = jnp.mean(y, axis=(0, 2, 3), keepdims=True)
    var = jnp.mean((y - mean) ** 2, axis=(0, 2, 3), keepdims=True)
    y_hat = (y - mean) * lax.rsqrt(var + EPS)
    out = y_hat * gamma.reshape(1, -1, 1, 1) + beta.reshape(1, -1, 1, 1)
    return jnp.maximum(out, 0.0)


if __name__ == "__main__":
    # SingleConv(in_ch=4, out_ch=8, kernel_size=3, stride=1, padding=1)
    N, C_IN, H, W = 2, 4, 16, 16
    C_OUT, KS, STRIDE, PAD = 8, 3, 1, 1

    key = jax.random.PRNGKey(0)
    kx, kwt = jax.random.split(key)
    x = jax.random.normal(kx, (N, C_IN, H, W), dtype=jnp.float32)
    fan_in = C_IN * KS * KS
    bound = 1.0 / math.sqrt(fan_in)
    weight = jax.random.uniform(kwt, (C_OUT, C_IN, KS, KS),
                                minval=-bound, maxval=bound, dtype=jnp.float32)
    gamma = jnp.ones((C_OUT,), dtype=jnp.float32)
    beta = jnp.zeros((C_OUT,), dtype=jnp.float32)

    # tq=128 at this toy size -> 3 q-tiles x 2 images = 6 grid steps, exercising
    # the cross-tile two-pass BN reduction; real shapes derive tq from VMEM.
    out = single_conv(x, weight, gamma, beta, STRIDE, PAD, tq=128)
    out = jax.block_until_ready(out)
    assert out.shape == (N, C_OUT, H, W), out.shape

    # Strict check vs. a reference fed the same bf16-rounded inputs the kernel's
    # MXU path sees (f32 accumulation / BN math on both sides).
    xb_ = x.astype(jnp.bfloat16).astype(jnp.float32)
    wb_ = weight.astype(jnp.bfloat16).astype(jnp.float32)
    ref_b = _reference(xb_, wb_, gamma, beta, STRIDE, PAD)
    err_b = float(jnp.max(jnp.abs(out - ref_b)))
    assert jnp.allclose(out, ref_b, atol=1e-4, rtol=1e-4), err_b

    # Looser sanity check against the pure-f32 reference (bf16 input rounding).
    ref_f = _reference(x, weight, gamma, beta, STRIDE, PAD)
    err_f = float(jnp.max(jnp.abs(out - ref_f)))
    assert jnp.allclose(out, ref_f, atol=5e-2, rtol=5e-2), err_f

    # Also exercise the large-K path (auto-chosen when K = kh*kw*C_in is big;
    # forced here): pass 1 streams y as bf16, pass 2 is matmul-free.
    out_sy = single_conv(x, weight, gamma, beta, STRIDE, PAD, store_y=True)
    out_sy = jax.block_until_ready(out_sy)
    err_sy = float(jnp.max(jnp.abs(out_sy - ref_b)))
    assert jnp.allclose(out_sy, ref_b, atol=5e-2, rtol=5e-2), err_sy

    print("KERNEL_OK")
</pallas_src>

<mosaic_0001>
module attributes {stable_mosaic.version = 11 : i64} {
  func.func @_stats_kernel(%arg0: i32, %arg1: i32, %arg2: memref<1x4x128xbf16, #tpu.memory_space<vmem>>, %arg3: memref<1x4x128xbf16, #tpu.memory_space<vmem>>, %arg4: memref<1x128xf32, #tpu.memory_space<vmem>>, %arg5: memref<9x8x4xbf16, #tpu.memory_space<vmem>>, %arg6: memref<1x1x8x2xf32, #tpu.memory_space<vmem>>) attributes {dimension_semantics = [#tpu.dimension_semantics<parallel>, #tpu.dimension_semantics<parallel>], iteration_bounds = array<i64: 2, 3>, scalar_prefetch = 0 : i64, scratch_operands = 0 : i64, tpu.core_type = #tpu.core_type<tc>, window_params = [{transform_indices = @transform_0, window_bounds = array<i64: 1, 4, 128>}, {transform_indices = @transform_1, window_bounds = array<i64: 1, 4, 128>}, {transform_indices = @transform_2, window_bounds = array<i64: 1, 128>}, {pipeline_mode = #tpu.pipeline_mode<synchronous>, transform_indices = @transform_3, window_bounds = array<i64: 9, 8, 4>}, {transform_indices = @transform_4, window_bounds = array<i64: 1, 1, 8, 2>}]} {
    %c0 = arith.constant 0 : index
    %c0_0 = arith.constant 0 : index
    %c0_1 = arith.constant 0 : index
    %0 = vector.load %arg2[%c0, %c0_0, %c0_1] : memref<1x4x128xbf16, #tpu.memory_space<vmem>>, vector<1x4x128xbf16>
    %1 = vector.shape_cast %0 : vector<1x4x128xbf16> to vector<4x128xbf16>
    %c0_2 = arith.constant 0 : index
    %c0_3 = arith.constant 0 : index
    %c0_4 = arith.constant 0 : index
    %2 = vector.load %arg3[%c0_2, %c0_3, %c0_4] : memref<1x4x128xbf16, #tpu.memory_space<vmem>>, vector<1x4x128xbf16>
    %3 = vector.shape_cast %2 : vector<1x4x128xbf16> to vector<4x128xbf16>
    %4 = tpu.concatenate %1, %3 in 1 : vector<4x128xbf16>, vector<4x128xbf16> -> vector<4x256xbf16>
    %5 = vector.extract_strided_slice %4 {offsets = [0, 0], sizes = [4, 128], strides = [1, 1]} : vector<4x256xbf16> to vector<4x128xbf16>
    %c0_5 = arith.constant 0 : index
    %c0_6 = arith.constant 0 : index
    %c0_7 = arith.constant 0 : index
    %6 = vector.load %arg5[%c0_5, %c0_6, %c0_7] : memref<9x8x4xbf16, #tpu.memory_space<vmem>>, vector<1x8x4xbf16>
    %7 = vector.shape_cast %6 : vector<1x8x4xbf16> to vector<8x4xbf16>
    %cst = arith.constant dense<0.000000e+00> : vector<8x128xf32>
    %8 = tpu.matmul %7, %5, %cst {dimension_numbers = #tpu.dot_dimension_numbers<[1], [0], [0], [1], [0, 0, 1, 1], [], []>} : vector<8x4xbf16>, vector<4x128xbf16>, vector<8x128xf32> -> vector<8x128xf32>
    %9 = vector.extract_strided_slice %4 {offsets = [0, 1], sizes = [4, 128], strides = [1, 1]} : vector<4x256xbf16> to vector<4x128xbf16>
    %c1 = arith.constant 1 : index
    %c0_8 = arith.constant 0 : index
    %c0_9 = arith.constant 0 : index
    %10 = vector.load %arg5[%c1, %c0_8, %c0_9] : memref<9x8x4xbf16, #tpu.memory_space<vmem>>, vector<1x8x4xbf16>
    %11 = vector.shape_cast %10 : vector<1x8x4xbf16> to vector<8x4xbf16>
    %cst_10 = arith.constant dense<0.000000e+00> : vector<8x128xf32>
    %12 = tpu.matmul %11, %9, %cst_10 {dimension_numbers = #tpu.dot_dimension_numbers<[1], [0], [0], [1], [0, 0, 1, 1], [], []>} : vector<8x4xbf16>, vector<4x128xbf16>, vector<8x128xf32> -> vector<8x128xf32>
    %13 = arith.addf %8, %12 : vector<8x128xf32>
    %14 = vector.extract_strided_slice %4 {offsets = [0, 2], sizes = [4, 128], strides = [1, 1]} : vector<4x256xbf16> to vector<4x128xbf16>
    %c2 = arith.constant 2 : index
    %c0_11 = arith.constant 0 : index
    %c0_12 = arith.constant 0 : index
    %15 = vector.load %arg5[%c2, %c0_11, %c0_12] : memref<9x8x4xbf16, #tpu.memory_space<vmem>>, vector<1x8x4xbf16>
    %16 = vector.shape_cast %15 : vector<1x8x4xbf16> to vector<8x4xbf16>
    %cst_13 = arith.constant dense<0.000000e+00> : vector<8x128xf32>
    %17 = tpu.matmul %16, %14, %cst_13 {dimension_numbers = #tpu.dot_dimension_numbers<[1], [0], [0], [1], [0, 0, 1, 1], [], []>} : vector<8x4xbf16>, vector<4x128xbf16>, vector<8x128xf32> -> vector<8x128xf32>
    %18 = arith.addf %13, %17 : vector<8x128xf32>
    %19 = vector.extract_strided_slice %4 {offsets = [0, 18], sizes = [4, 128], strides = [1, 1]} : vector<4x256xbf16> to vector<4x128xbf16>
    %c3 = arith.constant 3 : index
    %c0_14 = arith.constant 0 : index
    %c0_15 = arith.constant 0 : index
    %20 = vector.load %arg5[%c3, %c0_14, %c0_15] : memref<9x8x4xbf16, #tpu.memory_space<vmem>>, vector<1x8x4xbf16>
    %21 = vector.shape_cast %20 : vector<1x8x4xbf16> to vector<8x4xbf16>
    %cst_16 = arith.constant dense<0.000000e+00> : vector<8x128xf32>
    %22 = tpu.matmul %21, %19, %cst_16 {dimension_numbers = #tpu.dot_dimension_numbers<[1], [0], [0], [1], [0, 0, 1, 1], [], []>} : vector<8x4xbf16>, vector<4x128xbf16>, vector<8x128xf32> -> vector<8x128xf32>
    %23 = arith.addf %18, %22 : vector<8x128xf32>
    %24 = vector.extract_strided_slice %4 {offsets = [0, 19], sizes = [4, 128], strides = [1, 1]} : vector<4x256xbf16> to vector<4x128xbf16>
    %c4 = arith.constant 4 : index
    %c0_17 = arith.constant 0 : index
    %c0_18 = arith.constant 0 : index
    %25 = vector.load %arg5[%c4, %c0_17, %c0_18] : memref<9x8x4xbf16, #tpu.memory_space<vmem>>, vector<1x8x4xbf16>
    %26 = vector.shape_cast %25 : vector<1x8x4xbf16> to vector<8x4xbf16>
    %cst_19 = arith.constant dense<0.000000e+00> : vector<8x128xf32>
    %27 = tpu.matmul %26, %24, %cst_19 {dimension_numbers = #tpu.dot_dimension_numbers<[1], [0], [0], [1], [0, 0, 1, 1], [], []>} : vector<8x4xbf16>, vector<4x128xbf16>, vector<8x128xf32> -> vector<8x128xf32>
    %28 = arith.addf %23, %27 : vector<8x128xf32>
    %29 = vector.extract_strided_slice %4 {offsets = [0, 20], sizes = [4, 128], strides = [1, 1]} : vector<4x256xbf16> to vector<4x128xbf16>
    %c5 = arith.constant 5 : index
    %c0_20 = arith.constant 0 : index
    %c0_21 = arith.constant 0 : index
    %30 = vector.load %arg5[%c5, %c0_20, %c0_21] : memref<9x8x4xbf16, #tpu.memory_space<vmem>>, vector<1x8x4xbf16>
    %31 = vector.shape_cast %30 : vector<1x8x4xbf16> to vector<8x4xbf16>
    %cst_22 = arith.constant dense<0.000000e+00> : vector<8x128xf32>
    %32 = tpu.matmul %31, %29, %cst_22 {dimension_numbers = #tpu.dot_dimension_numbers<[1], [0], [0], [1], [0, 0, 1, 1], [], []>} : vector<8x4xbf16>, vector<4x128xbf16>, vector<8x128xf32> -> vector<8x128xf32>
    %33 = arith.addf %28, %32 : vector<8x128xf32>
    %34 = vector.extract_strided_slice %4 {offsets = [0, 36], sizes = [4, 128], strides = [1, 1]} : vector<4x256xbf16> to vector<4x128xbf16>
    %c6 = arith.constant 6 : index
    %c0_23 = arith.constant 0 : index
    %c0_24 = arith.constant 0 : index
    %35 = vector.load %arg5[%c6, %c0_23, %c0_24] : memref<9x8x4xbf16, #tpu.memory_space<vmem>>, vector<1x8x4xbf16>
    %36 = vector.shape_cast %35 : vector<1x8x4xbf16> to vector<8x4xbf16>
    %cst_25 = arith.constant dense<0.000000e+00> : vector<8x128xf32>
    %37 = tpu.matmul %36, %34, %cst_25 {dimension_numbers = #tpu.dot_dimension_numbers<[1], [0], [0], [1], [0, 0, 1, 1], [], []>} : vector<8x4xbf16>, vector<4x128xbf16>, vector<8x128xf32> -> vector<8x128xf32>
    %38 = arith.addf %33, %37 : vector<8x128xf32>
    %39 = vector.extract_strided_slice %4 {offsets = [0, 37], sizes = [4, 128], strides = [1, 1]} : vector<4x256xbf16> to vector<4x128xbf16>
    %c7 = arith.constant 7 : index
    %c0_26 = arith.constant 0 : index
    %c0_27 = arith.constant 0 : index
    %40 = vector.load %arg5[%c7, %c0_26, %c0_27] : memref<9x8x4xbf16, #tpu.memory_space<vmem>>, vector<1x8x4xbf16>
    %41 = vector.shape_cast %40 : vector<1x8x4xbf16> to vector<8x4xbf16>
    %cst_28 = arith.constant dense<0.000000e+00> : vector<8x128xf32>
    %42 = tpu.matmul %41, %39, %cst_28 {dimension_numbers = #tpu.dot_dimension_numbers<[1], [0], [0], [1], [0, 0, 1, 1], [], []>} : vector<8x4xbf16>, vector<4x128xbf16>, vector<8x128xf32> -> vector<8x128xf32>
    %43 = arith.addf %38, %42 : vector<8x128xf32>
    %44 = vector.extract_strided_slice %4 {offsets = [0, 38], sizes = [4, 128], strides = [1, 1]} : vector<4x256xbf16> to vector<4x128xbf16>
    %c8 = arith.constant 8 : index
    %c0_29 = arith.constant 0 : index
    %c0_30 = arith.constant 0 : index
    %45 = vector.load %arg5[%c8, %c0_29, %c0_30] : memref<9x8x4xbf16, #tpu.memory_space<vmem>>, vector<1x8x4xbf16>
    %46 = vector.shape_cast %45 : vector<1x8x4xbf16> to vector<8x4xbf16>
    %cst_31 = arith.constant dense<0.000000e+00> : vector<8x128xf32>
    %47 = tpu.matmul %46, %44, %cst_31 {dimension_numbers = #tpu.dot_dimension_numbers<[1], [0], [0], [1], [0, 0, 1, 1], [], []>} : vector<8x4xbf16>, vector<4x128xbf16>, vector<8x128xf32> -> vector<8x128xf32>
    %48 = arith.addf %43, %47 : vector<8x128xf32>
    %c0_32 = arith.constant 0 : index
    %c0_33 = arith.constant 0 : index
    %49 = vector.load %arg4[%c0_32, %c0_33] : memref<1x128xf32, #tpu.memory_space<vmem>>, vector<1x128xf32>
    %50 = vector.broadcast %49 : vector<1x128xf32> to vector<8x128xf32>
    %51 = arith.mulf %48, %50 : vector<8x128xf32>
    %cst_34 = arith.constant dense<0.000000e+00> : vector<8xf32>
    %52 = vector.multi_reduction <add>, %51, %cst_34 [1] : vector<8x128xf32> to vector<8xf32>
    %53 = vector.shape_cast %52 : vector<8xf32> to vector<8x1xf32>
    %54 = arith.mulf %51, %48 : vector<8x128xf32>
    %cst_35 = arith.constant dense<0.000000e+00> : vector<8xf32>
    %55 = vector.multi_reduction <add>, %54, %cst_35 [1] : vector<8x128xf32> to vector<8xf32>
    %56 = vector.shape_cast %55 : vector<8xf32> to vector<8x1xf32>
    %57 = tpu.concatenate %53, %56 in 1 : vector<8x1xf32>, vector<8x1xf32> -> vector<8x2xf32>
    %c0_36 = arith.constant 0 : index
    %c0_37 = arith.constant 0 : index
    %c0_38 = arith.constant 0 : index
    %c0_39 = arith.constant 0 : index
    %58 = vector.load %arg6[%c0_36, %c0_37, %c0_38, %c0_39] : memref<1x1x8x2xf32, #tpu.memory_space<vmem>>, vector<1x1x8x2xf32>
    %59 = vector.shape_cast %58 : vector<1x1x8x2xf32> to vector<8x2xf32>
    %60 = vector.shape_cast %57 : vector<8x2xf32> to vector<1x1x8x2xf32>
    tpu.vector_store %arg6[%c0_36, %c0_37, %c0_38, %c0_39], %60 {strides = array<i32>} : memref<1x1x8x2xf32, #tpu.memory_space<vmem>>, vector<1x1x8x2xf32>,
    return
  }
  func.func @transform_0(%arg0: i32, %arg1: i32) -> (i32, i32, i32) {
    %c0_i32 = arith.constant 0 : i32
    %c0_i32_0 = arith.constant 0 : i32
    return %arg0, %c0_i32, %arg1 : i32, i32, i32
  }
  func.func @transform_1(%arg0: i32, %arg1: i32) -> (i32, i32, i32) {
    %c1_i32 = arith.constant 1 : i32
    %0 = arith.addi %arg1, %c1_i32 : i32
    %c0_i32 = arith.constant 0 : i32
    %c0_i32_0 = arith.constant 0 : i32
    return %arg0, %c0_i32, %0 : i32, i32, i32
  }
  func.func @transform_2(%arg0: i32, %arg1: i32) -> (i32, i32) {
    %c0_i32 = arith.constant 0 : i32
    %c0_i32_0 = arith.constant 0 : i32
    return %c0_i32, %arg1 : i32, i32
  }
  func.func @transform_3(%arg0: i32, %arg1: i32) -> (i32, i32, i32) {
    %c0_i32 = arith.constant 0 : i32
    %c0_i32_0 = arith.constant 0 : i32
    %c0_i32_1 = arith.constant 0 : i32
    %c0_i32_2 = arith.constant 0 : i32
    return %c0_i32, %c0_i32_0, %c0_i32_1 : i32, i32, i32
  }
  func.func @transform_4(%arg0: i32, %arg1: i32) -> (i32, i32, i32, i32) {
    %c0_i32 = arith.constant 0 : i32
    %c0_i32_0 = arith.constant 0 : i32
    %c0_i32_1 = arith.constant 0 : i32
    return %arg0, %arg1, %c0_i32, %c0_i32_0 : i32, i32, i32, i32
  }
}

</mosaic_0001>

<llo_original>
// kernel: tpu_custom_call.1
$region0: #{tpu_custom_call.1}
  #allocation0 [shape = 'u32[]', space=smem, size = 0x4, offset = 0x4, fixed_abs, tag = 'smem constant byte address 0x4 - core index']
  #allocation1 [shape = 'u32[144,128]{1,0:T(1,128)}', space=vmem, size = 0x12000, scoped, tag = 'internal scratch']
  %s0 = inlined_call_operand.vmem [shape: bf16[2,4,512], index: 0, kind: input, shape index: {}]
  %s1 = inlined_call_operand.vmem [shape: bf16[2,4,512], index: 1, kind: input, shape index: {}]
  %s2 = inlined_call_operand.vmem [shape: f32[1,384], index: 2, kind: input, shape index: {}]
  %s3 = inlined_call_operand.vmem [shape: bf16[9,8,4], index: 3, kind: input, shape index: {}]
  %s4 = inlined_call_operand.vmem [shape: f32[2,3,8,2], index: 4, kind: output, shape index: {}]
  %s5 = sld [smem:[#allocation0]]
  $region49: #{tpu_custom_call.1} parent=0
    _
  %s7 = ssub.s32 1, %s5
  %s8 = scalar_select 0, %s7, %s5
  loop: start=0, step=1, limit=8
  $region2: #{tpu_custom_call.1} parent=0 // loop_pre_header
    _
  $region3: #{tpu_custom_call.1} parent=0 // loop_header
    %s10 = sphi 0, %s14
    %p11 = scmp.ge.s32.totalorder %s10, 8
    %s17 = sphi 0, %s29
    %s18 = sphi 0, %s25
    %s19 = sphi 0, %s17
    %s20 = sphi 0, %s18
    %s21 = sphi 0, %s19
    %s22 = sphi 0, %s20
    %s34 = sphi 0, %s36
    %s37 = sphi 0, %s34
    %s38 = sphi 0, %s37
    %s54 = sphi 0, %s38
    %s64 = sphi 0, %s66
    %s67 = sphi 0, %s64
    %s68 = sphi 0, %s67
    %s84 = sphi 0, %s68
    %s90 = sphi 0, %s92
    %s93 = sphi 0, %s90
    %s94 = sphi 0, %s93
    %s110 = sphi 0, %s94
    %s114 = sphi 0, %s114
    %s116 = sphi 0, %s114
    %s117 = sphi 0, %s116
    %s131 = sphi 0, %s117
    %s139 = sphi 0, %s141
    %s142 = sphi 0, %s139
    %s143 = sphi 0, %s142
    %s159 = sphi 0, %s143
  $region4: #{tpu_custom_call.1} parent=0 // loop_header_branch
    %13 = sbr.rel (%p11) target = $region8
  $region5: #{tpu_custom_call.1} parent=0 // loop_body
    %s15 = ssub.s32 %s10, 1
    %s16 = ssub.s32 %s10, 2
    %s23 = sadd.s32 1, %s18
    %p24 = scmp.ge.s32.totalorder %s23, 3
    %s25 = scalar_select %p24, 0, %s23
    %s26 = sadd.s32 1, %s17
    %s27 = scalar_select %p24, %s26, %s17
    %p28 = scmp.ge.s32.totalorder %s27, 2
    %s29 = scalar_select %p28, 0, %s27
    %s30 = ssub.s32 %s17, %s29
    %s31 = ssub.s32 %s18, %s25
    %s32 = sor.u32 %s30, %s31
    %p33 = scmp.eq.s32.totalorder %s32, 0
    %s35 = sadd.s32 %s34, 1
    %s36 = scalar_select %p33, %s34, %s35
    %p39 = pneg %p33
    %p40 = scmp.eq.s32.totalorder %s10, 5
    %p41 = por %p39, %p40
    %p42 = scmp.ne.s32.totalorder %s34, %s37
    %p43 = scmp.eq.s32.totalorder %s10, 0
    %p44 = por %p42, %p43
    %p45 = scmp.ne.s32.totalorder %s34, %s37
    %p46 = scmp.eq.s32.totalorder %s15, 5
    %p47 = por %p45, %p46
    %p48 = scmp.ne.s32.totalorder %s37, %s38
    %p49 = scmp.eq.s32.totalorder %s15, 0
    %p50 = por %p48, %p49
    %p51 = scmp.ne.s32.totalorder %s37, %s38
    %p52 = scmp.eq.s32.totalorder %s16, 5
    %p53 = por %p51, %p52
    %p55 = scmp.ne.s32.totalorder %s38, %s54
    %p56 = scmp.eq.s32.totalorder %s16, 0
    %p57 = por %p55, %p56
    %s58 = sadd.s32 %s18, 1
    %s59 = sadd.s32 %s25, 1
    %s60 = ssub.s32 %s17, %s29
    %s61 = ssub.s32 %s58, %s59
    %s62 = sor.u32 %s60, %s61
    %p63 = scmp.eq.s32.totalorder %s62, 0
    %s65 = sadd.s32 %s64, 1
    %s66 = scalar_select %p63, %s64, %s65
    %p69 = pneg %p63
    %p70 = scmp.eq.s32.totalorder %s10, 5
    %p71 = por %p69, %p70
    %p72 = scmp.ne.s32.totalorder %s64, %s67
    %p73 = scmp.eq.s32.totalorder %s10, 0
    %p74 = por %p72, %p73
    %p75 = scmp.ne.s32.totalorder %s64, %s67
    %p76 = scmp.eq.s32.totalorder %s15, 5
    %p77 = por %p75, %p76
    %p78 = scmp.ne.s32.totalorder %s67, %s68
    %p79 = scmp.eq.s32.totalorder %s15, 0
    %p80 = por %p78, %p79
    %p81 = scmp.ne.s32.totalorder %s67, %s68
    %p82 = scmp.eq.s32.totalorder %s16, 5
    %p83 = por %p81, %p82
    %p85 = scmp.ne.s32.totalorder %s68, %s84
    %p86 = scmp.eq.s32.totalorder %s16, 0
    %p87 = por %p85, %p86
    %s88 = ssub.s32 %s18, %s25
    %p89 = scmp.eq.s32.totalorder %s88, 0
    %s91 = sadd.s32 %s90, 1
    %s92 = scalar_select %p89, %s90, %s91
    %p95 = pneg %p89
    %p96 = scmp.eq.s32.totalorder %s10, 5
    %p97 = por %p95, %p96
    %p98 = scmp.ne.s32.totalorder %s90, %s93
    %p99 = scmp.eq.s32.totalorder %s10, 0
    %p100 = por %p98, %p99
    %p101 = scmp.ne.s32.totalorder %s90, %s93
    %p102 = scmp.eq.s32.totalorder %s15, 5
    %p103 = por %p101, %p102
    %p104 = scmp.ne.s32.totalorder %s93, %s94
    %p105 = scmp.eq.s32.totalorder %s15, 0
    %p106 = por %p104, %p105
    %p107 = scmp.ne.s32.totalorder %s93, %s94
    %p108 = scmp.eq.s32.totalorder %s16, 5
    %p109 = por %p107, %p108
    %p111 = scmp.ne.s32.totalorder %s94, %s110
    %p112 = scmp.eq.s32.totalorder %s16, 0
    %p113 = por %p111, %p112
    %s115 = sadd.s32 %s114, 1
    %p118 = scmp.eq.s32.totalorder %s10, 5
    %p119 = scmp.ne.s32.totalorder %s114, %s116
    %p120 = scmp.eq.s32.totalorder %s10, 0
    %p121 = por %p119, %p120
    %p122 = scmp.ne.s32.totalorder %s114, %s116
    %p123 = scmp.eq.s32.totalorder %s15, 5
    %p124 = por %p122, %p123
    %p125 = scmp.ne.s32.totalorder %s116, %s117
    %p126 = scmp.eq.s32.totalorder %s15, 0
    %p127 = por %p125, %p126
    %p128 = scmp.ne.s32.totalorder %s116, %s117
    %p129 = scmp.eq.s32.totalorder %s16, 5
    %p130 = por %p128, %p129
    %p132 = scmp.ne.s32.totalorder %s117, %s131
    %p133 = scmp.eq.s32.totalorder %s16, 0
    %p134 = por %p132, %p133
    %s135 = ssub.s32 %s17, %s29
    %s136 = ssub.s32 %s18, %s25
    %s137 = sor.u32 %s135, %s136
    %p138 = scmp.eq.s32.totalorder %s137, 0
    %s140 = sadd.s32 %s139, 1
    %s141 = scalar_select %p138, %s139, %s140
    %p144 = pneg %p138
    %p145 = scmp.eq.s32.totalorder %s10, 5
    %p146 = por %p144, %p145
    %p147 = scmp.ne.s32.totalorder %s139, %s142
    %p148 = scmp.eq.s32.totalorder %s10, 0
    %p149 = por %p147, %p148
    %p150 = scmp.ne.s32.totalorder %s139, %s142
    %p151 = scmp.eq.s32.totalorder %s15, 5
    %p152 = por %p150, %p151
    %p153 = scmp.ne.s32.totalorder %s142, %s143
    %p154 = scmp.eq.s32.totalorder %s15, 0
    %p155 = por %p153, %p154
    %p156 = scmp.ne.s32.totalorder %s142, %s143
    %p157 = scmp.eq.s32.totalorder %s16, 5
    %p158 = por %p156, %p157
    %p160 = scmp.ne.s32.totalorder %s143, %s159
    %p161 = scmp.eq.s32.totalorder %s16, 0
    %p162 = por %p160, %p161
    %p163 = scmp.le.s32.totalorder 1, %s10
    %p164 = scmp.lt.s32.totalorder %s10, 7
    %p165 = pnand %p163, %p164
    %p166 = pneg %p165
    // Predicated region
    $region9: #{tpu_custom_call.1} parent=5 // pred_check
      _
    $region10: #{tpu_custom_call.1} parent=5 // pred_check_branch
      %168 = sbr.rel (%p165) target = $region12
    $region11: #{tpu_custom_call.1} parent=5 // pred_region
      %s169 = ssub.s32 %s10, 1
      // Predicated region
      $region13: #{tpu_custom_call.1} parent=11 // pred_check
        %p170 = pneg %p127
      $region14: #{tpu_custom_call.1} parent=11 // pred_check_branch
        %172 = sbr.rel (%p170) target = $region16
      $region15: #{tpu_custom_call.1} parent=11 // pred_region
        _
      $region16: #{tpu_custom_call.1} parent=11 // pred_fallthru
        _
    $region12: #{tpu_custom_call.1} parent=5 // pred_fallthru
      _
    %p173 = scmp.lt.s32.totalorder %s10, 6
    // Predicated region
    $region17: #{tpu_custom_call.1} parent=5 // pred_check
      %p174 = pneg %p173
    $region18: #{tpu_custom_call.1} parent=5 // pred_check_branch
      %176 = sbr.rel (%p174) target = $region20
    $region19: #{tpu_custom_call.1} parent=5 // pred_region
      // Predicated region
      $region21: #{tpu_custom_call.1} parent=19 // pred_check
        %p177 = pneg %p44
      $region22: #{tpu_custom_call.1} parent=19 // pred_check_branch
        %179 = sbr.rel (%p177) target = $region24
      $region23: #{tpu_custom_call.1} parent=19 // pred_region
        %p180 = scmp.lt.s32.totalorder %s17, 1
        %s181 = scalar_select %p180, %s17, 1
        %p182 = scmp.lt.s32.totalorder %s18, 3
        %s183 = scalar_select %p182, %s18, 3
        %s184 = smul.addr %s181, 4
        %s185 = sadd.s32 %s183, %s184
        %s186 = smul.addr %s185, 2
        %s187 = scalar_lea.vmem %s0, %s186
      $region24: #{tpu_custom_call.1} parent=19 // pred_fallthru
        _
      // Predicated region
      $region25: #{tpu_custom_call.1} parent=19 // pred_check
        %p188 = pneg %p74
      $region26: #{tpu_custom_call.1} parent=19 // pred_check_branch
        %190 = sbr.rel (%p188) target = $region28
      $region27: #{tpu_custom_call.1} parent=19 // pred_region
        %s191 = sadd.s32 %s18, 1
        %p192 = scmp.lt.s32.totalorder %s17, 1
        %s193 = scalar_select %p192, %s17, 1
        %p194 = scmp.lt.s32.totalorder %s191, 3
        %s195 = scalar_select %p194, %s191, 3
        %s196 = smul.addr %s193, 4
        %s197 = sadd.s32 %s195, %s196
        %s198 = smul.addr %s197, 2
        %s199 = scalar_lea.vmem %s1, %s198
        %s200 = sadd.s32 %s18, 1
      $region28: #{tpu_custom_call.1} parent=19 // pred_fallthru
        _
      // Predicated region
      $region29: #{tpu_custom_call.1} parent=19 // pred_check
        %p201 = pneg %p100
      $region30: #{tpu_custom_call.1} parent=19 // pred_check_branch
        %203 = sbr.rel (%p201) target = $region32
      $region31: #{tpu_custom_call.1} parent=19 // pred_region
        %p204 = scmp.lt.s32.totalorder %s18, 2
        %s205 = scalar_select %p204, %s18, 2
        %s206 = scalar_lea.vmem %s2, %s205
      $region32: #{tpu_custom_call.1} parent=19 // pred_fallthru
        _
    $region20: #{tpu_custom_call.1} parent=5 // pred_fallthru
      _
    %p207 = scmp.le.s32.totalorder 1, %s10
    %p208 = scmp.lt.s32.totalorder %s10, 7
    %p209 = pnand %p207, %p208
    %p210 = pneg %p209
    // Predicated region
    $region33: #{tpu_custom_call.1} parent=5 // pred_check
      _
    $region34: #{tpu_custom_call.1} parent=5 // pred_check_branch
      %212 = sbr.rel (%p209) target = $region36
    $region35: #{tpu_custom_call.1} parent=5 // pred_region
      %s213 = ssub.s32 %s10, 1
      %p214 = scmp.lt.s32.totalorder %s19, 1
      %s215 = scalar_select %p214, %s19, 1
      %p216 = scmp.lt.s32.totalorder %s20, 3
      %s217 = scalar_select %p216, %s20, 3
      %s218 = smul.addr %s215, 4
      %s219 = sadd.s32 %s217, %s218
      %s220 = smul.addr %s219, 2
      %s221 = scalar_lea.vmem %s0, %s220
      %p222 = pneg %p50
      %p223 = pneg %p47
      %s224 = sadd.s32 %s20, 1
      %p225 = scmp.lt.s32.totalorder %s19, 1
      %s226 = scalar_select %p225, %s19, 1
      %p227 = scmp.lt.s32.totalorder %s224, 3
      %s228 = scalar_select %p227, %s224, 3
      %s229 = smul.addr %s226, 4
      %s230 = sadd.s32 %s228, %s229
      %s231 = smul.addr %s230, 2
      %s232 = scalar_lea.vmem %s1, %s231
      %p233 = pneg %p80
      %p234 = pneg %p77
      %p235 = scmp.lt.s32.totalorder %s20, 2
      %s236 = scalar_select %p235, %s20, 2
      %s237 = scalar_lea.vmem %s2, %s236
      %p238 = pneg %p106
      %p239 = pneg %p103
      %p240 = pneg %p127
      %p241 = pneg %p124
      %p242 = pneg %p155
      %p243 = pneg %p152
      %p244 = scmp.lt.s32.totalorder %s19, 1
      %s245 = scalar_select %p244, %s19, 1
      %p246 = scmp.lt.s32.totalorder %s20, 2
      %s247 = scalar_select %p246, %s20, 2
      %s248 = smul.addr %s245, 3
      %s249 = sadd.s32 %s247, %s248
      %s250 = smul.addr %s249, 8
      %s251 = scalar_lea.vmem %s4, %s250
      %p252 = scmp.lt.s32.totalorder %s19, 1
      %s253 = scalar_select %p252, %s19, 1
      %p254 = scmp.lt.s32.totalorder %s20, 3
      %s255 = scalar_select %p254, %s20, 3
      %s256 = smul.addr %s253, 4
      %s257 = sadd.s32 %s255, %s256
      %s258 = smul.addr %s257, 2
      %s259 = scalar_lea.vmem %s0, %s258
      %s260 = sadd.s32 %s20, 1
      %p261 = scmp.lt.s32.totalorder %s19, 1
      %s262 = scalar_select %p261, %s19, 1
      %p263 = scmp.lt.s32.totalorder %s260, 3
      %s264 = scalar_select %p263, %s260, 3
      %s265 = smul.addr %s262, 4
      %s266 = sadd.s32 %s264, %s265
      %s267 = smul.addr %s266, 2
      %s268 = scalar_lea.vmem %s1, %s267
      %s269 = sadd.s32 %s20, 1
      %p270 = scmp.lt.s32.totalorder %s20, 2
      %s271 = scalar_select %p270, %s20, 2
      %s272 = scalar_lea.vmem %s2, %s271
      %p273 = scmp.lt.s32.totalorder %s19, 1
      %s274 = scalar_select %p273, %s19, 1
      %p275 = scmp.lt.s32.totalorder %s20, 2
      %s276 = scalar_select %p275, %s20, 2
      %s277 = smul.addr %s274, 3
      %s278 = sadd.s32 %s276, %s277
      %s279 = smul.addr %s278, 8
      %s280 = scalar_lea.vmem %s4, %s279
      %v282 = vld [vmem:[%s259] sm:$0x3]
      %v283 = vld [vmem:[%s268] sm:$0x3]
      %v284 = vld [vmem:[%s3] sm:$0xf]
      %s285 = scalar_lea.vmem %s3, 4
      %v286 = vld [vmem:[%s285] sm:$0xf]
      %289 = vrot.lane.b32.xlu0 %v282, 127
      %v290 = vpop.permute.xlu0 %289
      %291 = vrot.lane.b32.xlu0 %v283, 127
      %v292 = vpop.permute.xlu0 %291
      %vm293 = vcmask 1039360
      %v294 = vsel %vm293, %v290, %v292
      %vm295 = vcmask 31744
      %v297 = vsel %vm295, %v286, 0
      %vm299 = vcmask 1041408
      %v301 = vsel %vm299, %v294, 0
      %303 = vmatprep.subr.bf16.mxu0 0
      %304 = vmatpush1.bf16.msra.mxu0 %v301
      %305 = vmatprep.subr.bf16.mxu0 0
      %306 = vmatpush1.bf16.msra.mxu0 0
      %307 = vmatprep.subr.bf16.mxu0 0
      %308 = vmatpush1.bf16.msra.mxu0 0
      %309 = vmatprep.subr.bf16.mxu0 0
      %310 = vmatpush1.bf16.msra.mxu0 0
      %311 = vmatprep.subr.bf16.mxu0 0
      %312 = vmatpush1.bf16.msra.mxu0 0
      %313 = vmatprep.subr.bf16.mxu0 0
      %314 = vmatpush1.bf16.msra.mxu0 0
      %315 = vmatprep.subr.bf16.mxu0 0
      %316 = vmatpush1.bf16.msra.mxu0 0
      %317 = vmatprep.subr.bf16.mxu0 0
      %318 = vmatpush1.bf16.msra.mxu0 0
      %319 = vmatprep.subr.bf16.mxu0 0
      %320 = vmatpush1.bf16.msra.mxu0 0
      %321 = vmatprep.subr.bf16.mxu0 0
      %322 = vmatpush1.bf16.msra.mxu0 0
      %323 = vmatprep.subr.bf16.mxu0 0
      %324 = vmatpush1.bf16.msra.mxu0 0
      %325 = vmatprep.subr.bf16.mxu0 0
      %326 = vmatpush1.bf16.msra.mxu0 0
      %327 = vmatprep.subr.bf16.mxu0 0
      %328 = vmatpush1.bf16.msra.mxu0 0
      %329 = vmatprep.subr.bf16.mxu0 0
      %330 = vmatpush1.bf16.msra.mxu0 0
      %331 = vmatprep.subr.bf16.mxu0 0
      %332 = vmatpush1.bf16.msra.mxu0 0
      %333 = vmatprep.subr.bf16.mxu0 0
      %334 = vmatpush1.bf16.msra.mxu0 0
      %335 = vmatprep.mubr.bf16.mxu0 0
      %336 = vmatmul.mubr.bf16.gmra.mrb[0].mxu0 %v297
      %v337 = vpop.f32.mrb[0].mxu0
      %v338 = vadd.f32 0.0, %v337
      %v339 = vpop.f32.mrb[0].mxu0
      %v340 = vpop.f32.mrb[0].mxu0
      %v341 = vpop.f32.mrb[0].mxu0
      %342 = vdwg.mxu0
      %v344 = vsel %vm295, %v284, 0
      %v347 = vsel %vm299, %v282, 0
      %349 = vmatprep.subr.bf16.mxu0 0
      %350 = vmatpush1.bf16.msra.mxu0 %v347
      %351 = vmatprep.subr.bf16.mxu0 0
      %352 = vmatpush1.bf16.msra.mxu0 0
      %353 = vmatprep.subr.bf16.mxu0 0
      %354 = vmatpush1.bf16.msra.mxu0 0
      %355 = vmatprep.subr.bf16.mxu0 0
      %356 = vmatpush1.bf16.msra.mxu0 0
      %357 = vmatprep.subr.bf16.mxu0 0
      %358 = vmatpush1.bf16.msra.mxu0 0
      %359 = vmatprep.subr.bf16.mxu0 0
      %360 = vmatpush1.bf16.msra.mxu0 0
      %361 = vmatprep.subr.bf16.mxu0 0
      %362 = vmatpush1.bf16.msra.mxu0 0
      %363 = vmatprep.subr.bf16.mxu0 0
      %364 = vmatpush1.bf16.msra.mxu0 0
      %365 = vmatprep.subr.bf16.mxu0 0
      %366 = vmatpush1.bf16.msra.mxu0 0
      %367 = vmatprep.subr.bf16.mxu0 0
      %368 = vmatpush1.bf16.msra.mxu0 0
      %369 = vmatprep.subr.bf16.mxu0 0
      %370 = vmatpush1.bf16.msra.mxu0 0
      %371 = vmatprep.subr.bf16.mxu0 0
      %372 = vmatpush1.bf16.msra.mxu0 0
      %373 = vmatprep.subr.bf16.mxu0 0
      %374 = vmatpush1.bf16.msra.mxu0 0
      %375 = vmatprep.subr.bf16.mxu0 0
      %376 = vmatpush1.bf16.msra.mxu0 0
      %377 = vmatprep.subr.bf16.mxu0 0
      %378 = vmatpush1.bf16.msra.mxu0 0
      %379 = vmatprep.subr.bf16.mxu0 0
      %380 = vmatpush1.bf16.msra.mxu0 0
      %381 = vmatprep.mubr.bf16.mxu0 0
      %382 = vmatmul.mubr.bf16.gmra.mrb[0].mxu0 %v344
      %v383 = vpop.f32.mrb[0].mxu0
      %v384 = vadd.f32 %v338, %v383
      %v385 = vpop.f32.mrb[0].mxu0
      %v386 = vpop.f32.mrb[0].mxu0
      %v387 = vpop.f32.mrb[0].mxu0
      %388 = vdwg.mxu0
      %s389 = scalar_lea.vmem %s3, 8
      %v390 = vld [vmem:[%s389] sm:$0xf]
      %391 = vrot.lane.b32.xlu0 %v282, 126
      %v392 = vpop.permute.xlu0 %391
      %393 = vrot.lane.b32.xlu0 %v283, 126
      %v394 = vpop.permute.xlu0 %393
      %vm395 = vcmask 1031168
      %v396 = vsel %vm395, %v392, %v394
      %v398 = vsel %vm295, %v390, 0
      %v401 = vsel %vm299, %v396, 0
      %403 = vmatprep.subr.bf16.mxu0 0
      %404 = vmatpush1.bf16.msra.mxu0 %v401
      %405 = vmatprep.subr.bf16.mxu0 0
      %406 = vmatpush1.bf16.msra.mxu0 0
      %407 = vmatprep.subr.bf16.mxu0 0
      %408 = vmatpush1.bf16.msra.mxu0 0
      %409 = vmatprep.subr.bf16.mxu0 0
      %410 = vmatpush1.bf16.msra.mxu0 0
      %411 = vmatprep.subr.bf16.mxu0 0
      %412 = vmatpush1.bf16.msra.mxu0 0
      %413 = vmatprep.subr.bf16.mxu0 0
      %414 = vmatpush1.bf16.msra.mxu0 0
      %415 = vmatprep.subr.bf16.mxu0 0
      %416 = vmatpush1.bf16.msra.mxu0 0
      %417 = vmatprep.subr.bf16.mxu0 0
      %418 = vmatpush1.bf16.msra.mxu0 0
      %419 = vmatprep.subr.bf16.mxu0 0
      %420 = vmatpush1.bf16.msra.mxu0 0
      %421 = vmatprep.subr.bf16.mxu0 0
      %422 = vmatpush1.bf16.msra.mxu0 0
      %423 = vmatprep.subr.bf16.mxu0 0
      %424 = vmatpush1.bf16.msra.mxu0 0
      %425 = vmatprep.subr.bf16.mxu0 0
      %426 = vmatpush1.bf16.msra.mxu0 0
      %427 = vmatprep.subr.bf16.mxu0 0
      %428 = vmatpush1.bf16.msra.mxu0 0
      %429 = vmatprep.subr.bf16.mxu0 0
      %430 = vmatpush1.bf16.msra.mxu0 0
      %431 = vmatprep.subr.bf16.mxu0 0
      %432 = vmatpush1.bf16.msra.mxu0 0
      %433 = vmatprep.subr.bf16.mxu0 0
      %434 = vmatpush1.bf16.msra.mxu0 0
      %435 = vmatprep.mubr.bf16.mxu0 0
      %436 = vmatmul.mubr.bf16.gmra.mrb[0].mxu0 %v398
      %v437 = vpop.f32.mrb[0].mxu0
      %v438 = vadd.f32 0.0, %v437
      %v439 = vpop.f32.mrb[0].mxu0
      %v440 = vpop.f32.mrb[0].mxu0
      %v441 = vpop.f32.mrb[0].mxu0
      %442 = vdwg.mxu0
      %v443 = vadd.f32 %v384, %v438
      %s444 = scalar_lea.vmem %s3, 12
      %v445 = vld [vmem:[%s444] sm:$0xf]
      %446 = vrot.lane.b32.xlu0 %v282, 110
      %v447 = vpop.permute.xlu0 %446
      %448 = vrot.lane.b32.xlu0 %v283, 110
      %v449 = vpop.permute.xlu0 %448
      %vm450 = vcmask 900096
      %v451 = vsel %vm450, %v447, %v449
      %v453 = vsel %vm295, %v445, 0
      %v456 = vsel %vm299, %v451, 0
      %458 = vmatprep.subr.bf16.mxu0 0
      %459 = vmatpush1.bf16.msra.mxu0 %v456
      %460 = vmatprep.subr.bf16.mxu0 0
      %461 = vmatpush1.bf16.msra.mxu0 0
      %462 = vmatprep.subr.bf16.mxu0 0
      %463 = vmatpush1.bf16.msra.mxu0 0
      %464 = vmatprep.subr.bf16.mxu0 0
      %465 = vmatpush1.bf16.msra.mxu0 0
      %466 = vmatprep.subr.bf16.mxu0 0
      %467 = vmatpush1.bf16.msra.mxu0 0
      %468 = vmatprep.subr.bf16.mxu0 0
      %469 = vmatpush1.bf16.msra.mxu0 0
      %470 = vmatprep.subr.bf16.mxu0 0
      %471 = vmatpush1.bf16.msra.mxu0 0
      %472 = vmatprep.subr.bf16.mxu0 0
      %473 = vmatpush1.bf16.msra.mxu0 0
      %474 = vmatprep.subr.bf16.mxu0 0
      %475 = vmatpush1.bf16.msra.mxu0 0
      %476 = vmatprep.subr.bf16.mxu0 0
      %477 = vmatpush1.bf16.msra.mxu0 0
      %478 = vmatprep.subr.bf16.mxu0 0
      %479 = vmatpush1.bf16.msra.mxu0 0
      %480 = vmatprep.subr.bf16.mxu0 0
      %481 = vmatpush1.bf16.msra.mxu0 0
      %482 = vmatprep.subr.bf16.mxu0 0
      %483 = vmatpush1.bf16.msra.mxu0 0
      %484 = vmatprep.subr.bf16.mxu0 0
      %485 = vmatpush1.bf16.msra.mxu0 0
      %486 = vmatprep.subr.bf16.mxu0 0
      %487 = vmatpush1.bf16.msra.mxu0 0
      %488 = vmatprep.subr.bf16.mxu0 0
      %489 = vmatpush1.bf16.msra.mxu0 0
      %490 = vmatprep.mubr.bf16.mxu0 0
      %491 = vmatmul.mubr.bf16.gmra.mrb[0].mxu0 %v453
      %v492 = vpop.f32.mrb[0].mxu0
      %v493 = vadd.f32 0.0, %v492
      %v494 = vpop.f32.mrb[0].mxu0
      %v495 = vpop.f32.mrb[0].mxu0
      %v496 = vpop.f32.mrb[0].mxu0
      %497 = vdwg.mxu0
      %v498 = vadd.f32 %v443, %v493
      %s499 = scalar_lea.vmem %s3, 16
      %v500 = vld [vmem:[%s499] sm:$0xf]
      %501 = vrot.lane.b32.xlu0 %v282, 109
      %v502 = vpop.permute.xlu0 %501
      %503 = vrot.lane.b32.xlu0 %v283, 109
      %v504 = vpop.permute.xlu0 %503
      %vm505 = vcmask 891904
      %v506 = vsel %vm505, %v502, %v504
      %v508 = vsel %vm295, %v500, 0
      %v511 = vsel %vm299, %v506, 0
      %513 = vmatprep.subr.bf16.mxu0 0
      %514 = vmatpush1.bf16.msra.mxu0 %v511
      %515 = vmatprep.subr.bf16.mxu0 0
      %516 = vmatpush1.bf16.msra.mxu0 0
      %517 = vmatprep.subr.bf16.mxu0 0
      %518 = vmatpush1.bf16.msra.mxu0 0
      %519 = vmatprep.subr.bf16.mxu0 0
      %520 = vmatpush1.bf16.msra.mxu0 0
      %521 = vmatprep.subr.bf16.mxu0 0
      %522 = vmatpush1.bf16.msra.mxu0 0
      %523 = vmatprep.subr.bf16.mxu0 0
      %524 = vmatpush1.bf16.msra.mxu0 0
      %525 = vmatprep.subr.bf16.mxu0 0
      %526 = vmatpush1.bf16.msra.mxu0 0
      %527 = vmatprep.subr.bf16.mxu0 0
      %528 = vmatpush1.bf16.msra.mxu0 0
      %529 = vmatprep.subr.bf16.mxu0 0
      %530 = vmatpush1.bf16.msra.mxu0 0
      %531 = vmatprep.subr.bf16.mxu0 0
      %532 = vmatpush1.bf16.msra.mxu0 0
      %533 = vmatprep.subr.bf16.mxu0 0
      %534 = vmatpush1.bf16.msra.mxu0 0
      %535 = vmatprep.subr.bf16.mxu0 0
      %536 = vmatpush1.bf16.msra.mxu0 0
      %537 = vmatprep.subr.bf16.mxu0 0
      %538 = vmatpush1.bf16.msra.mxu0 0
      %539 = vmatprep.subr.bf16.mxu0 0
      %540 = vmatpush1.bf16.msra.mxu0 0
      %541 = vmatprep.subr.bf16.mxu0 0
      %542 = vmatpush1.bf16.msra.mxu0 0
      %543 = vmatprep.subr.bf16.mxu0 0
      %544 = vmatpush1.bf16.msra.mxu0 0
      %545 = vmatprep.mubr.bf16.mxu0 0
      %546 = vmatmul.mubr.bf16.gmra.mrb[0].mxu0 %v508
      %v547 = vpop.f32.mrb[0].mxu0
      %v548 = vadd.f32 0.0, %v547
      %v549 = vpop.f32.mrb[0].mxu0
      %v550 = vpop.f32.mrb[0].mxu0
      %v551 = vpop.f32.mrb[0].mxu0
      %552 = vdwg.mxu0
      %v553 = vadd.f32 %v498, %v548
      %s554 = scalar_lea.vmem %s3, 20
      %v555 = vld [vmem:[%s554] sm:$0xf]
      %556 = vrot.lane.b32.xlu0 %v282, 108
      %v557 = vpop.permute.xlu0 %556
      %558 = vrot.lane.b32.xlu0 %v283, 108
      %v559 = vpop.permute.xlu0 %558
      %vm560 = vcmask 883712
      %v561 = vsel %vm560, %v557, %v559
      %v563 = vsel %vm295, %v555, 0
      %v566 = vsel %vm299, %v561, 0
      %568 = vmatprep.subr.bf16.mxu0 0
      %569 = vmatpush1.bf16.msra.mxu0 %v566
      %570 = vmatprep.subr.bf16.mxu0 0
      %571 = vmatpush1.bf16.msra.mxu0 0
      %572 = vmatprep.subr.bf16.mxu0 0
      %573 = vmatpush1.bf16.msra.mxu0 0
      %574 = vmatprep.subr.bf16.mxu0 0
      %575 = vmatpush1.bf16.msra.mxu0 0
      %576 = vmatprep.subr.bf16.mxu0 0
      %577 = vmatpush1.bf16.msra.mxu0 0
      %578 = vmatprep.subr.bf16.mxu0 0
      %579 = vmatpush1.bf16.msra.mxu0 0
      %580 = vmatprep.subr.bf16.mxu0 0
      %581 = vmatpush1.bf16.msra.mxu0 0
      %582 = vmatprep.subr.bf16.mxu0 0
      %583 = vmatpush1.bf16.msra.mxu0 0
      %584 = vmatprep.subr.bf16.mxu0 0
      %585 = vmatpush1.bf16.msra.mxu0 0
      %586 = vmatprep.subr.bf16.mxu0 0
      %587 = vmatpush1.bf16.msra.mxu0 0
      %588 = vmatprep.subr.bf16.mxu0 0
      %589 = vmatpush1.bf16.msra.mxu0 0
      %590 = vmatprep.subr.bf16.mxu0 0
      %591 = vmatpush1.bf16.msra.mxu0 0
      %592 = vmatprep.subr.bf16.mxu0 0
      %593 = vmatpush1.bf16.msra.mxu0 0
      %594 = vmatprep.subr.bf16.mxu0 0
      %595 = vmatpush1.bf16.msra.mxu0 0
      %596 = vmatprep.subr.bf16.mxu0 0
      %597 = vmatpush1.bf16.msra.mxu0 0
      %598 = vmatprep.subr.bf16.mxu0 0
      %599 = vmatpush1.bf16.msra.mxu0 0
      %600 = vmatprep.mubr.bf16.mxu0 0
      %601 = vmatmul.mubr.bf16.gmra.mrb[0].mxu0 %v563
      %v602 = vpop.f32.mrb[0].mxu0
      %v603 = vadd.f32 0.0, %v602
      %v604 = vpop.f32.mrb[0].mxu0
      %v605 = vpop.f32.mrb[0].mxu0
      %v606 = vpop.f32.mrb[0].mxu0
      %607 = vdwg.mxu0
      %v608 = vadd.f32 %v553, %v603
      %s609 = scalar_lea.vmem %s3, 24
      %v610 = vld [vmem:[%s609] sm:$0xf]
      %611 = vrot.lane.b32.xlu0 %v282, 92
      %v612 = vpop.permute.xlu0 %611
      %613 = vrot.lane.b32.xlu0 %v283, 92
      %v614 = vpop.permute.xlu0 %613
      %vm615 = vcmask 752640
      %v616 = vsel %vm615, %v612, %v614
      %v618 = vsel %vm295, %v610, 0
      %v621 = vsel %vm299, %v616, 0
      %623 = vmatprep.subr.bf16.mxu0 0
      %624 = vmatpush1.bf16.msra.mxu0 %v621
      %625 = vmatprep.subr.bf16.mxu0 0
      %626 = vmatpush1.bf16.msra.mxu0 0
      %627 = vmatprep.subr.bf16.mxu0 0
      %628 = vmatpush1.bf16.msra.mxu0 0
      %629 = vmatprep.subr.bf16.mxu0 0
      %630 = vmatpush1.bf16.msra.mxu0 0
      %631 = vmatprep.subr.bf16.mxu0 0
      %632 = vmatpush1.bf16.msra.mxu0 0
      %633 = vmatprep.subr.bf16.mxu0 0
      %634 = vmatpush1.bf16.msra.mxu0 0
      %635 = vmatprep.subr.bf16.mxu0 0
      %636 = vmatpush1.bf16.msra.mxu0 0
      %637 = vmatprep.subr.bf16.mxu0 0
      %638 = vmatpush1.bf16.msra.mxu0 0
      %639 = vmatprep.subr.bf16.mxu0 0
      %640 = vmatpush1.bf16.msra.mxu0 0
      %641 = vmatprep.subr.bf16.mxu0 0
      %642 = vmatpush1.bf16.msra.mxu0 0
      %643 = vmatprep.subr.bf16.mxu0 0
      %644 = vmatpush1.bf16.msra.mxu0 0
      %645 = vmatprep.subr.bf16.mxu0 0
      %646 = vmatpush1.bf16.msra.mxu0 0
      %647 = vmatprep.subr.bf16.mxu0 0
      %648 = vmatpush1.bf16.msra.mxu0 0
      %649 = vmatprep.subr.bf16.mxu0 0
      %650 = vmatpush1.bf16.msra.mxu0 0
      %651 = vmatprep.subr.bf16.mxu0 0
      %652 = vmatpush1.bf16.msra.mxu0 0
      %653 = vmatprep.subr.bf16.mxu0 0
      %654 = vmatpush1.bf16.msra.mxu0 0
      %655 = vmatprep.mubr.bf16.mxu0 0
      %656 = vmatmul.mubr.bf16.gmra.mrb[0].mxu0 %v618
      %v657 = vpop.f32.mrb[0].mxu0
      %v658 = vadd.f32 0.0, %v657
      %v659 = vpop.f32.mrb[0].mxu0
      %v660 = vpop.f32.mrb[0].mxu0
      %v661 = vpop.f32.mrb[0].mxu0
      %662 = vdwg.mxu0
      %v663 = vadd.f32 %v608, %v658
      %s664 = scalar_lea.vmem %s3, 28
      %v665 = vld [vmem:[%s664] sm:$0xf]
      %666 = vrot.lane.b32.xlu0 %v282, 91
      %v667 = vpop.permute.xlu0 %666
      %668 = vrot.lane.b32.xlu0 %v283, 91
      %v669 = vpop.permute.xlu0 %668
      %vm670 = vcmask 744448
      %v671 = vsel %vm670, %v667, %v669
      %v673 = vsel %vm295, %v665, 0
      %v676 = vsel %vm299, %v671, 0
      %678 = vmatprep.subr.bf16.mxu0 0
      %679 = vmatpush1.bf16.msra.mxu0 %v676
      %680 = vmatprep.subr.bf16.mxu0 0
      %681 = vmatpush1.bf16.msra.mxu0 0
      %682 = vmatprep.subr.bf16.mxu0 0
      %683 = vmatpush1.bf16.msra.mxu0 0
      %684 = vmatprep.subr.bf16.mxu0 0
      %685 = vmatpush1.bf16.msra.mxu0 0
      %686 = vmatprep.subr.bf16.mxu0 0
      %687 = vmatpush1.bf16.msra.mxu0 0
      %688 = vmatprep.subr.bf16.mxu0 0
      %689 = vmatpush1.bf16.msra.mxu0 0
      %690 = vmatprep.subr.bf16.mxu0 0
      %691 = vmatpush1.bf16.msra.mxu0 0
      %692 = vmatprep.subr.bf16.mxu0 0
      %693 = vmatpush1.bf16.msra.mxu0 0
      %694 = vmatprep.subr.bf16.mxu0 0
      %695 = vmatpush1.bf16.msra.mxu0 0
      %696 = vmatprep.subr.bf16.mxu0 0
      %697 = vmatpush1.bf16.msra.mxu0 0
      %698 = vmatprep.subr.bf16.mxu0 0
      %699 = vmatpush1.bf16.msra.mxu0 0
      %700 = vmatprep.subr.bf16.mxu0 0
      %701 = vmatpush1.bf16.msra.mxu0 0
      %702 = vmatprep.subr.bf16.mxu0 0
      %703 = vmatpush1.bf16.msra.mxu0 0
      %704 = vmatprep.subr.bf16.mxu0 0
      %705 = vmatpush1.bf16.msra.mxu0 0
      %706 = vmatprep.subr.bf16.mxu0 0
      %707 = vmatpush1.bf16.msra.mxu0 0
      %708 = vmatprep.subr.bf16.mxu0 0
      %709 = vmatpush1.bf16.msra.mxu0 0
      %710 = vmatprep.mubr.bf16.mxu0 0
      %711 = vmatmul.mubr.bf16.gmra.mrb[0].mxu0 %v673
      %v712 = vpop.f32.mrb[0].mxu0
      %v713 = vadd.f32 0.0, %v712
      %v714 = vpop.f32.mrb[0].mxu0
      %v715 = vpop.f32.mrb[0].mxu0
      %v716 = vpop.f32.mrb[0].mxu0
      %717 = vdwg.mxu0
      %v718 = vadd.f32 %v663, %v713
      %s719 = scalar_lea.vmem %s3, 32
      %v720 = vld [vmem:[%s719] sm:$0xf]
      %721 = vrot.lane.b32.xlu0 %v282, 90
      %v722 = vpop.permute.xlu0 %721
      %723 = vrot.lane.b32.xlu0 %v283, 90
      %v724 = vpop.permute.xlu0 %723
      %vm725 = vcmask 736256
      %v726 = vsel %vm725, %v722, %v724
      %v728 = vsel %vm295, %v720, 0
      %v731 = vsel %vm299, %v726, 0
      %733 = vmatprep.subr.bf16.mxu0 0
      %734 = vmatpush1.bf16.msra.mxu0 %v731
      %735 = vmatprep.subr.bf16.mxu0 0
      %736 = vmatpush1.bf16.msra.mxu0 0
      %737 = vmatprep.subr.bf16.mxu0 0
      %738 = vmatpush1.bf16.msra.mxu0 0
      %739 = vmatprep.subr.bf16.mxu0 0
      %740 = vmatpush1.bf16.msra.mxu0 0
      %741 = vmatprep.subr.bf16.mxu0 0
      %742 = vmatpush1.bf16.msra.mxu0 0
      %743 = vmatprep.subr.bf16.mxu0 0
      %744 = vmatpush1.bf16.msra.mxu0 0
      %745 = vmatprep.subr.bf16.mxu0 0
      %746 = vmatpush1.bf16.msra.mxu0 0
      %747 = vmatprep.subr.bf16.mxu0 0
      %748 = vmatpush1.bf16.msra.mxu0 0
      %749 = vmatprep.subr.bf16.mxu0 0
      %750 = vmatpush1.bf16.msra.mxu0 0
      %751 = vmatprep.subr.bf16.mxu0 0
      %752 = vmatpush1.bf16.msra.mxu0 0
      %753 = vmatprep.subr.bf16.mxu0 0
      %754 = vmatpush1.bf16.msra.mxu0 0
      %755 = vmatprep.subr.bf16.mxu0 0
      %756 = vmatpush1.bf16.msra.mxu0 0
      %757 = vmatprep.subr.bf16.mxu0 0
      %758 = vmatpush1.bf16.msra.mxu0 0
      %759 = vmatprep.subr.bf16.mxu0 0
      %760 = vmatpush1.bf16.msra.mxu0 0
      %761 = vmatprep.subr.bf16.mxu0 0
      %762 = vmatpush1.bf16.msra.mxu0 0
      %763 = vmatprep.subr.bf16.mxu0 0
      %764 = vmatpush1.bf16.msra.mxu0 0
      %765 = vmatprep.mubr.bf16.mxu0 0
      %766 = vmatmul.mubr.bf16.gmra.mrb[0].mxu0 %v728
      %v767 = vpop.f32.mrb[0].mxu0
      %v768 = vadd.f32 0.0, %v767
      %v769 = vpop.f32.mrb[0].mxu0
      %v770 = vpop.f32.mrb[0].mxu0
      %v771 = vpop.f32.mrb[0].mxu0
      %772 = vdwg.mxu0
      %v773 = vadd.f32 %v718, %v768
      %v774 = vld [vmem:[%s272] sm:$0x1]
      %v776 = vlaneseq
      %v777 = vshrl.u32 %v776, 7
      %v778 = vsub.s32 0, %v777
      %v779 = vrot.slane %v774, %v778
      %v781 = vmul.f32 %v773, %v779
      %782 = vadd.xlane.f32.xlu0 %v781
      %v783 = vpop.xlane.xlu0 %782
      %v784 = vmul.f32 %v781, %v773
      %785 = vadd.xlane.f32.xlu0 %v784
      %v786 = vpop.xlane.xlu0 %785
      %vm787 = vcmask 7168
      %v788 = vsel %vm787, %v783, %v786
      %vm789 = vcmask 15360
      %790 = vst.msk [vmem:[%s280] sm:$0xff] %vm789, %v788
      %p791 = scmp.lt.s32.totalorder %s19, 1
      %s792 = scalar_select %p791, %s19, 1
      %p793 = scmp.lt.s32.totalorder %s20, 2
      %s794 = scalar_select %p793, %s20, 2
      %s795 = smul.addr %s792, 3
      %s796 = sadd.s32 %s794, %s795
      %s797 = smul.addr %s796, 8
      %s798 = scalar_lea.vmem %s4, %s797
      // Predicated region
      $region37: #{tpu_custom_call.1} parent=35 // pred_check
        %p799 = pneg %p152
      $region38: #{tpu_custom_call.1} parent=35 // pred_check_branch
        %801 = sbr.rel (%p799) target = $region40
      $region39: #{tpu_custom_call.1} parent=35 // pred_region
        _
      $region40: #{tpu_custom_call.1} parent=35 // pred_fallthru
        _
    $region36: #{tpu_custom_call.1} parent=5 // pred_fallthru
      _
    %p802 = scmp.le.s32.totalorder 2, %s10
    // Predicated region
    $region41: #{tpu_custom_call.1} parent=5 // pred_check
      %p803 = pneg %p802
    $region42: #{tpu_custom_call.1} parent=5 // pred_check_branch
      %805 = sbr.rel (%p803) target = $region44
    $region43: #{tpu_custom_call.1} parent=5 // pred_region
      %s806 = ssub.s32 %s10, 2
      // Predicated region
      $region45: #{tpu_custom_call.1} parent=43 // pred_check
        %p807 = pneg %p158
      $region46: #{tpu_custom_call.1} parent=43 // pred_check_branch
        %809 = sbr.rel (%p807) target = $region48
      $region47: #{tpu_custom_call.1} parent=43 // pred_region
        %p810 = scmp.lt.s32.totalorder %s21, 1
        %s811 = scalar_select %p810, %s21, 1
        %p812 = scmp.lt.s32.totalorder %s22, 2
        %s813 = scalar_select %p812, %s22, 2
        %s814 = smul.addr %s811, 3
        %s815 = sadd.s32 %s813, %s814
        %s816 = smul.addr %s815, 8
        %s817 = scalar_lea.vmem %s4, %s816
      $region48: #{tpu_custom_call.1} parent=43 // pred_fallthru
        _
    $region44: #{tpu_custom_call.1} parent=5 // pred_fallthru
      _
  $region6: #{tpu_custom_call.1} parent=0 // loop_footer
    %s14 = sadd.s32 1, %s10
  $region7: #{tpu_custom_call.1} parent=0 // loop_footer_branch
    %9 = sbr.rel target = $region3
  $region8: #{tpu_custom_call.1} parent=0 // loop_exit
    _

</llo_original>
